<compile_context>
chip_gen: v5e
topology: v5e:2x2
jax: 0.10.0
libtpu: 0.0.40
codegen_flags: <defaults>
</compile_context>

<pallas_src>
import jax
import jax.numpy as jnp
from jax.experimental import pallas as pl
from jax.experimental.pallas import tpu as pltpu


# ----------------------------------------------------------------------------
# helpers
# ----------------------------------------------------------------------------
def _round_up(v, m):
    return (v + m - 1) // m * m


def _maybe_pad_2d(a, rows, cols):
    r, c = a.shape
    if r == rows and c == cols:
        return a                       # no-op: avoid an extra XLA pad copy
    return jnp.pad(a, ((0, rows - r), (0, cols - c)))


def _supports_pipeline_mode():
    # One-time, construction-only feature check (never wraps kernel execution).
    if not hasattr(pl, "Buffered"):
        return False
    try:
        pl.BlockSpec((8, 128), lambda i: (0, 0), pipeline_mode=pl.Buffered(1))
        return True
    except Exception:
        return False


_HAS_PIPELINE_MODE = _supports_pipeline_mode()
_SCRATCH_ALLOWANCE = 2 * 1024 * 1024      # Mosaic internal scratch / semaphores


def _default_vmem_budget():
    # ~85% of physical VMEM: ~54 MiB on v7x (64 MiB/TC), ~109 MiB on v5e/v6e.
    try:
        info = pltpu.get_tpu_info()
        cap = getattr(info, "vmem_capacity_bytes", None)
        if cap:
            return int(cap * 0.85)
    except Exception:
        pass
    return 48 * 1024 * 1024               # conservative fallback, safe on v7x


# ----------------------------------------------------------------------------
# kernels
# ----------------------------------------------------------------------------
def _ffn_resident_kernel(x_ref, w1_ref, b1_ref, w2_ref, b2_ref, o_ref):
    # x_ref : (bm, Dp)      w1_ref: (Dp, Hp) bf16   b1_ref: (1, Hp) f32
    # w2_ref: (Hp, Dp) bf16 b2_ref: (1, Dp) f32     o_ref : (bm, Dp)
    x = x_ref[...]
    h = jnp.dot(x.astype(jnp.bfloat16), w1_ref[...],
                preferred_element_type=jnp.float32) + b1_ref[...]
    h = jax.nn.gelu(h, approximate=True)          # tanh form -> EUP slot
    y = jnp.dot(h.astype(jnp.bfloat16), w2_ref[...],
                preferred_element_type=jnp.float32) + b2_ref[...]
    o_ref[...] = (y + x.astype(jnp.float32)).astype(o_ref.dtype)


def _ffn_htiled_kernel(x_ref, w1_ref, b1_ref, w2_ref, b2_ref, o_ref, acc_ref):
    # Hidden dim tiled over the trailing 'arbitrary' grid axis; f32 accumulator.
    k = pl.program_id(1)

    @pl.when(k == 0)
    def _():
        acc_ref[...] = jnp.zeros_like(acc_ref)

    x = x_ref[...]
    h = jnp.dot(x.astype(jnp.bfloat16), w1_ref[...],
                preferred_element_type=jnp.float32) + b1_ref[...]
    h = jax.nn.gelu(h, approximate=True)
    acc_ref[...] += jnp.dot(h.astype(jnp.bfloat16), w2_ref[...],
                            preferred_element_type=jnp.float32)

    @pl.when(k == pl.num_programs(1) - 1)
    def _():
        o_ref[...] = (acc_ref[...] + b2_ref[...]
                      + x.astype(jnp.float32)).astype(o_ref.dtype)


# ----------------------------------------------------------------------------
# wrapper
# ----------------------------------------------------------------------------
def residual_feedforward(x, w1, b1, w2, b2, *, block_rows=512,
                         hidden_block=None, vmem_limit_bytes=None):
    """FeedForward(x) + x fused in one Pallas kernel.  x: (B, N, D)."""
    B, N, D = x.shape
    H = w1.shape[1]
    M = B * N
    out_dtype = x.dtype

    if vmem_limit_bytes is None:
        vmem_limit_bytes = _default_vmem_budget()

    # Lane-dense feature dims (zero padding contributes exact zeros to both
    # matmuls).  TODO(synk): 256-align D/H on v6e/v7x (2x256x256 MXU) when the
    # raw dims are not already 256-multiples; 128 is correct on all chips.
    Dp = _round_up(D, 128)

    # Row tile: as large as possible, but guarantee >= 2 grid steps so both
    # v7x TensorCores get work; respect sublane alignment for the dtype.
    row_align = 8 if jnp.dtype(x.dtype).itemsize >= 4 else 16
    bm = min(block_rows, max(row_align, _round_up(pl.cdiv(M, 2), row_align)))
    bm = _round_up(bm, row_align)

    x_bytes = jnp.dtype(x.dtype).itemsize
    o_bytes = jnp.dtype(out_dtype).itemsize

    def resident_fit(bm_, hp_):
        w_bufs = 1 if _HAS_PIPELINE_MODE else 2
        est = (w_bufs * 2 * Dp * hp_ * 2              # w1 + w2, bf16
               + 2 * 4 * (hp_ + Dp)                   # biases (double-buffered)
               + 2 * bm_ * Dp * (x_bytes + o_bytes)   # x + out tiles, 2 bufs each
               + bm_ * hp_ * (4 + 2)                  # h in f32 + bf16
               + _SCRATCH_ALLOWANCE)
        return est <= vmem_limit_bytes

    def htiled_fit(bm_, th_):
        est = (2 * 2 * Dp * th_ * 2                   # w1/w2 tiles, 2 bufs, bf16
               + 2 * 4 * (th_ + Dp)                   # bias tiles
               + 2 * bm_ * Dp * (x_bytes + o_bytes)   # x + out tiles
               + bm_ * th_ * (4 + 2)                  # h chunk f32 + bf16
               + bm_ * Dp * 4                         # f32 accumulator scratch
               + _SCRATCH_ALLOWANCE)
        return est <= vmem_limit_bytes

    use_htiled = hidden_block is not None
    if not use_htiled:
        Hp = _round_up(H, 128)
        use_htiled = not resident_fit(bm, Hp)   # keep bm large; tile H instead

    if use_htiled:
        th = hidden_block if hidden_block is not None else 512
        th = _round_up(min(th, _round_up(H, 128)), 128)
        while not htiled_fit(bm, th) and (bm > row_align or th > 128):
            if th > 128:
                th = max(128, _round_up(th // 2, 128))
            else:
                bm = max(row_align, _round_up(bm // 2, row_align))
        Hp = _round_up(H, th)                   # th divides Hp exactly

    # Feature-dim padding only.  The token axis uses a cdiv grid with a
    # clipped tail block, so the activations are never copied host-side
    # (and for real ViT D/H, which are 128-multiples, no pad op is emitted).
    x2 = _maybe_pad_2d(x.reshape(M, D), M, Dp)
    w1p = _maybe_pad_2d(w1, Dp, Hp).astype(jnp.bfloat16)
    w2p = _maybe_pad_2d(w2, Hp, Dp).astype(jnp.bfloat16)
    b1p = _maybe_pad_2d(b1.reshape(1, H).astype(jnp.float32), 1, Hp)
    b2p = _maybe_pad_2d(b2.reshape(1, D).astype(jnp.float32), 1, Dp)

    nm = pl.cdiv(M, bm)

    if not use_htiled:
        # Grid-invariant weights: single VMEM buffer when supported (they are
        # DMA'd from HBM exactly once).
        w_kw = {"pipeline_mode": pl.Buffered(1)} if _HAS_PIPELINE_MODE else {}
        grid_spec = pltpu.PrefetchScalarGridSpec(
            num_scalar_prefetch=0,
            grid=(nm,),
            in_specs=[
                pl.BlockSpec((bm, Dp), lambda i: (i, 0)),            # x tile
                pl.BlockSpec((Dp, Hp), lambda i: (0, 0), **w_kw),    # w1
                pl.BlockSpec((1, Hp), lambda i: (0, 0)),             # b1
                pl.BlockSpec((Hp, Dp), lambda i: (0, 0), **w_kw),    # w2
                pl.BlockSpec((1, Dp), lambda i: (0, 0)),             # b2
            ],
            out_specs=pl.BlockSpec((bm, Dp), lambda i: (i, 0)),
        )
        call = pl.pallas_call(
            _ffn_resident_kernel,
            out_shape=jax.ShapeDtypeStruct((M, Dp), out_dtype),
            grid_spec=grid_spec,
            compiler_params=pltpu.CompilerParams(
                dimension_semantics=("parallel",),
                vmem_limit_bytes=vmem_limit_bytes,
            ),
        )
    else:
        nh = Hp // th
        grid_spec = pltpu.PrefetchScalarGridSpec(
            num_scalar_prefetch=0,
            grid=(nm, nh),
            in_specs=[
                pl.BlockSpec((bm, Dp), lambda i, k: (i, 0)),         # x tile
                pl.BlockSpec((Dp, th), lambda i, k: (0, k)),         # w1 chunk
                pl.BlockSpec((1, th), lambda i, k: (0, k)),          # b1 chunk
                pl.BlockSpec((th, Dp), lambda i, k: (k, 0)),         # w2 chunk
                pl.BlockSpec((1, Dp), lambda i, k: (0, 0)),          # b2
            ],
            out_specs=pl.BlockSpec((bm, Dp), lambda i, k: (i, 0)),
            scratch_shapes=[pltpu.VMEM((bm, Dp), jnp.float32)],
        )
        call = pl.pallas_call(
            _ffn_htiled_kernel,
            out_shape=jax.ShapeDtypeStruct((M, Dp), out_dtype),
            grid_spec=grid_spec,
            compiler_params=pltpu.CompilerParams(
                dimension_semantics=("parallel", "arbitrary"),
                vmem_limit_bytes=vmem_limit_bytes,
            ),
        )

    out = call(x2, w1p, b1p, w2p, b2p)
    if Dp != D:
        out = out[:, :D]
    return out.reshape(B, N, D)


# ----------------------------------------------------------------------------
# demo / self-test
# ----------------------------------------------------------------------------
if __name__ == "__main__":
    key = jax.random.PRNGKey(0)

    def make_params(k, D, H):
        k1, kb1, k2, kb2 = jax.random.split(k, 4)
        w1 = jax.random.normal(k1, (D, H), jnp.float32) * (1.0 / D ** 0.5)
        b1 = jax.random.normal(kb1, (H,), jnp.float32) * 0.02
        w2 = jax.random.normal(k2, (H, D), jnp.float32) * (1.0 / H ** 0.5)
        b2 = jax.random.normal(kb2, (D,), jnp.float32) * 0.02
        return w1, b1, w2, b2

    def reference(x, w1, b1, w2, b2):
        # Mirrors the kernel numerics: bf16 MXU operands, f32 accumulation,
        # tanh GELU, f32 residual add.
        h = jnp.dot(x.astype(jnp.bfloat16), w1.astype(jnp.bfloat16),
                    preferred_element_type=jnp.float32) + b1
        h = jax.nn.gelu(h, approximate=True)
        y = jnp.dot(h.astype(jnp.bfloat16), w2.astype(jnp.bfloat16),
                    preferred_element_type=jnp.float32) + b2
        return (y + x.astype(jnp.float32)).astype(x.dtype)

    # Case 1: resident-weights path (batch=2, seq=8, dim=32, hidden=64).
    B, N, D, H = 2, 8, 32, 64
    kx, kp, key = jax.random.split(key, 3)
    x = jax.random.normal(kx, (B, N, D), jnp.float32)
    w1, b1, w2, b2 = make_params(kp, D, H)
    out = residual_feedforward(x, w1, b1, w2, b2)
    jax.block_until_ready(out)
    ref = reference(x.reshape(-1, D), w1, b1, w2, b2).reshape(B, N, D)
    assert jnp.allclose(out, ref, atol=1e-2, rtol=1e-2), "resident path mismatch"

    # Case 2: forced H-tiled accumulator path (the v7x large-H fallback),
    # hidden=256 tiled into two 128-wide chunks over the 'arbitrary' axis.
    B, N, D, H = 2, 8, 32, 256
    kx, kp, key = jax.random.split(key, 3)
    x = jax.random.normal(kx, (B, N, D), jnp.float32)
    w1, b1, w2, b2 = make_params(kp, D, H)
    out = residual_feedforward(x, w1, b1, w2, b2, hidden_block=128)
    jax.block_until_ready(out)
    ref = reference(x.reshape(-1, D), w1, b1, w2, b2).reshape(B, N, D)
    assert jnp.allclose(out, ref, atol=1e-2, rtol=1e-2), "H-tiled path mismatch"

    print("KERNEL_OK")
</pallas_src>

<mosaic_0001>
module attributes {stable_mosaic.version = 11 : i64} {
  func.func @_ffn_resident_kernel(%arg0: i32, %arg1: memref<8x128xf32, #tpu.memory_space<vmem>>, %arg2: memref<128x128xbf16, #tpu.memory_space<vmem>>, %arg3: memref<1x128xf32, #tpu.memory_space<vmem>>, %arg4: memref<128x128xbf16, #tpu.memory_space<vmem>>, %arg5: memref<1x128xf32, #tpu.memory_space<vmem>>, %arg6: memref<8x128xf32, #tpu.memory_space<vmem>>) attributes {dimension_semantics = [#tpu.dimension_semantics<parallel>], iteration_bounds = array<i64: 2>, scalar_prefetch = 0 : i64, scratch_operands = 0 : i64, tpu.core_type = #tpu.core_type<tc>, window_params = [{transform_indices = @transform_0, window_bounds = array<i64: 8, 128>}, {pipeline_mode = #tpu.pipeline_mode<synchronous>, transform_indices = @transform_1, window_bounds = array<i64: 128, 128>}, {pipeline_mode = #tpu.pipeline_mode<synchronous>, transform_indices = @transform_2, window_bounds = array<i64: 1, 128>}, {pipeline_mode = #tpu.pipeline_mode<synchronous>, transform_indices = @transform_3, window_bounds = array<i64: 128, 128>}, {pipeline_mode = #tpu.pipeline_mode<synchronous>, transform_indices = @transform_4, window_bounds = array<i64: 1, 128>}, {transform_indices = @transform_5, window_bounds = array<i64: 8, 128>}]} {
    %c0 = arith.constant 0 : index
    %c0_0 = arith.constant 0 : index
    %0 = vector.load %arg1[%c0, %c0_0] : memref<8x128xf32, #tpu.memory_space<vmem>>, vector<8x128xf32>
    %1 = arith.truncf %0 : vector<8x128xf32> to vector<8x128xbf16>
    %c0_1 = arith.constant 0 : index
    %c0_2 = arith.constant 0 : index
    %2 = vector.load %arg2[%c0_1, %c0_2] : memref<128x128xbf16, #tpu.memory_space<vmem>>, vector<128x128xbf16>
    %cst = arith.constant dense<0.000000e+00> : vector<8x128xf32>
    %3 = tpu.matmul %1, %2, %cst {dimension_numbers = #tpu.dot_dimension_numbers<[1], [0], [0], [1], [0, 0, 1, 1], [], []>} : vector<8x128xbf16>, vector<128x128xbf16>, vector<8x128xf32> -> vector<8x128xf32>
    %c0_3 = arith.constant 0 : index
    %c0_4 = arith.constant 0 : index
    %4 = vector.load %arg3[%c0_3, %c0_4] : memref<1x128xf32, #tpu.memory_space<vmem>>, vector<1x128xf32>
    %5 = vector.broadcast %4 : vector<1x128xf32> to vector<8x128xf32>
    %6 = arith.addf %3, %5 : vector<8x128xf32>
    %7 = arith.mulf %6, %6 : vector<8x128xf32>
    %8 = arith.mulf %6, %7 : vector<8x128xf32>
    %cst_5 = arith.constant 4.471500e-02 : f32
    %9 = vector.broadcast %cst_5 : f32 to vector<8x128xf32>
    %10 = arith.mulf %9, %8 : vector<8x128xf32>
    %11 = arith.addf %6, %10 : vector<8x128xf32>
    %cst_6 = arith.constant 0.797884583 : f32
    %12 = vector.broadcast %cst_6 : f32 to vector<8x128xf32>
    %13 = arith.mulf %12, %11 : vector<8x128xf32>
    %14 = math.tanh %13 : vector<8x128xf32>
    %cst_7 = arith.constant 1.000000e+00 : f32
    %15 = vector.broadcast %cst_7 : f32 to vector<8x128xf32>
    %16 = arith.addf %15, %14 : vector<8x128xf32>
    %cst_8 = arith.constant 5.000000e-01 : f32
    %17 = vector.broadcast %cst_8 : f32 to vector<8x128xf32>
    %18 = arith.mulf %17, %16 : vector<8x128xf32>
    %19 = arith.mulf %6, %18 : vector<8x128xf32>
    %20 = arith.truncf %19 : vector<8x128xf32> to vector<8x128xbf16>
    %c0_9 = arith.constant 0 : index
    %c0_10 = arith.constant 0 : index
    %21 = vector.load %arg4[%c0_9, %c0_10] : memref<128x128xbf16, #tpu.memory_space<vmem>>, vector<128x128xbf16>
    %cst_11 = arith.constant dense<0.000000e+00> : vector<8x128xf32>
    %22 = tpu.matmul %20, %21, %cst_11 {dimension_numbers = #tpu.dot_dimension_numbers<[1], [0], [0], [1], [0, 0, 1, 1], [], []>} : vector<8x128xbf16>, vector<128x128xbf16>, vector<8x128xf32> -> vector<8x128xf32>
    %c0_12 = arith.constant 0 : index
    %c0_13 = arith.constant 0 : index
    %23 = vector.load %arg5[%c0_12, %c0_13] : memref<1x128xf32, #tpu.memory_space<vmem>>, vector<1x128xf32>
    %24 = vector.broadcast %23 : vector<1x128xf32> to vector<8x128xf32>
    %25 = arith.addf %22, %24 : vector<8x128xf32>
    %26 = arith.addf %25, %0 : vector<8x128xf32>
    %c0_14 = arith.constant 0 : index
    %c0_15 = arith.constant 0 : index
    %27 = vector.load %arg6[%c0_14, %c0_15] : memref<8x128xf32, #tpu.memory_space<vmem>>, vector<8x128xf32>
    tpu.vector_store %arg6[%c0_14, %c0_15], %26 {strides = array<i32>} : memref<8x128xf32, #tpu.memory_space<vmem>>, vector<8x128xf32>,
    return
  }
  func.func @transform_0(%arg0: i32) -> (i32, i32) {
    %c0_i32 = arith.constant 0 : i32
    %c0_i32_0 = arith.constant 0 : i32
    return %arg0, %c0_i32 : i32, i32
  }
  func.func @transform_1(%arg0: i32) -> (i32, i32) {
    %c0_i32 = arith.constant 0 : i32
    %c0_i32_0 = arith.constant 0 : i32
    %c0_i32_1 = arith.constant 0 : i32
    return %c0_i32, %c0_i32_0 : i32, i32
  }
  func.func @transform_2(%arg0: i32) -> (i32, i32) {
    %c0_i32 = arith.constant 0 : i32
    %c0_i32_0 = arith.constant 0 : i32
    %c0_i32_1 = arith.constant 0 : i32
    return %c0_i32, %c0_i32_0 : i32, i32
  }
  func.func @transform_3(%arg0: i32) -> (i32, i32) {
    %c0_i32 = arith.constant 0 : i32
    %c0_i32_0 = arith.constant 0 : i32
    %c0_i32_1 = arith.constant 0 : i32
    return %c0_i32, %c0_i32_0 : i32, i32
  }
  func.func @transform_4(%arg0: i32) -> (i32, i32) {
    %c0_i32 = arith.constant 0 : i32
    %c0_i32_0 = arith.constant 0 : i32
    %c0_i32_1 = arith.constant 0 : i32
    return %c0_i32, %c0_i32_0 : i32, i32
  }
  func.func @transform_5(%arg0: i32) -> (i32, i32) {
    %c0_i32 = arith.constant 0 : i32
    %c0_i32_0 = arith.constant 0 : i32
    return %arg0, %c0_i32 : i32, i32
  }
}

</mosaic_0001>

<llo_original>
// kernel: tpu_custom_call.1
$region0: #{tpu_custom_call.1}
  #allocation0 [shape = 'u32[]', space=smem, size = 0x4, offset = 0x4, fixed_abs, tag = 'smem constant byte address 0x4 - core index']
  #allocation1 [shape = 'u32[72,128]{1,0:T(1,128)}', space=vmem, size = 0x9000, scoped, tag = 'internal scratch']
  %s0 = inlined_call_operand.hbm [shape: f32[16,128], index: 0, kind: input, shape index: {}]
  %s1 = inlined_call_operand.hbm [shape: bf16[128,128], index: 1, kind: input, shape index: {}]
  %s2 = inlined_call_operand.vmem [shape: f32[1,128], index: 2, kind: input, shape index: {}]
  %s3 = inlined_call_operand.hbm [shape: bf16[128,128], index: 3, kind: input, shape index: {}]
  %s4 = inlined_call_operand.vmem [shape: f32[1,128], index: 4, kind: input, shape index: {}]
  %s5 = inlined_call_operand.hbm [shape: f32[16,128], index: 5, kind: output, shape index: {}]
  %s6 = sld [smem:[#allocation0]]
  $region65: #{tpu_custom_call.1} parent=0
    _
  %s8 = ssub.s32 1, %s6
  %s9 = scalar_select 0, %s8, %s6
  $region1: #{tpu_custom_call.1} parent=0
    #allocation2 [shape = 'u8[8192]{0}', space=vmem, size = 0x2000, scoped, tag = 'input window, operand 0']
    #allocation3 [shape = 's32[2]{0}', space=sflag, size = 0x8, scoped, tag = 'scoped memory for tpu_custom_call.1']
    #allocation4 [shape = 's32[2]{0}', space=sflag, size = 0x8, scoped, tag = 'scoped memory for tpu_custom_call.1']
    #allocation5 [shape = 'u8[32768]{0}', space=vmem, size = 0x8000, scoped, tag = 'input window, operand 1, single buffered']
    #allocation6 [shape = 's32[1]{0}', space=sflag, size = 0x4, scoped, tag = 'scoped memory for tpu_custom_call.1']
    #allocation7 [shape = 'u8[32768]{0}', space=vmem, size = 0x8000, scoped, tag = 'input window, operand 3, single buffered']
    #allocation8 [shape = 'u8[8192]{0}', space=vmem, size = 0x2000, scoped, tag = 'output window, operand 0']
    %10 = vsyncpa [#allocation3], 0
    %s11 = scalar_lea.sflag [#allocation3], 1
    %12 = vsyncpa %s11, 0
    %13 = vsyncpa [#allocation6], 0
    %14 = vsyncpa [#allocation4], 0
    %s15 = scalar_lea.sflag [#allocation4], 1
    %16 = vsyncpa %s15, 0
    loop: start=0, step=1, limit=4
    $region2: #{tpu_custom_call.1} parent=1 // loop_pre_header
      _
    $region3: #{tpu_custom_call.1} parent=1 // loop_header
      %s18 = sphi 0, %s22
      %p19 = scmp.ge.s32.totalorder %s18, 4
      %s28 = sphi 0, %s30
      %s31 = sphi 0, %s28
      %s32 = sphi 0, %s31
      %s48 = sphi 0, %s32
      %s52 = sphi 0, %s52
      %s54 = sphi 0, %s52
      %s55 = sphi 0, %s54
      %s69 = sphi 0, %s55
      %s73 = sphi 0, %s73
      %s75 = sphi 0, %s73
      %s76 = sphi 0, %s75
      %s90 = sphi 0, %s76
      %s94 = sphi 0, %s94
      %s96 = sphi 0, %s94
      %s97 = sphi 0, %s96
      %s111 = sphi 0, %s97
      %s115 = sphi 0, %s115
      %s117 = sphi 0, %s115
      %s118 = sphi 0, %s117
      %s132 = sphi 0, %s118
      %s138 = sphi 0, %s140
      %s141 = sphi 0, %s138
      %s142 = sphi 0, %s141
      %s158 = sphi 0, %s142
    $region4: #{tpu_custom_call.1} parent=1 // loop_header_branch
      %21 = sbr.rel (%p19) target = $region8
    $region5: #{tpu_custom_call.1} parent=1 // loop_body
      %s23 = ssub.s32 %s18, 1
      %s24 = ssub.s32 %s18, 2
      %s25 = sadd.s32 %s18, 1
      %s26 = ssub.s32 %s18, %s25
      %p27 = scmp.eq.s32.totalorder %s26, 0
      %s29 = sadd.s32 %s28, 1
      %s30 = scalar_select %p27, %s28, %s29
      %p33 = pneg %p27
      %p34 = scmp.eq.s32.totalorder %s18, 1
      %p35 = por %p33, %p34
      %p36 = scmp.ne.s32.totalorder %s28, %s31
      %p37 = scmp.eq.s32.totalorder %s18, 0
      %p38 = por %p36, %p37
      %p39 = scmp.ne.s32.totalorder %s28, %s31
      %p40 = scmp.eq.s32.totalorder %s23, 1
      %p41 = por %p39, %p40
      %p42 = scmp.ne.s32.totalorder %s31, %s32
      %p43 = scmp.eq.s32.totalorder %s23, 0
      %p44 = por %p42, %p43
      %p45 = scmp.ne.s32.totalorder %s31, %s32
      %p46 = scmp.eq.s32.totalorder %s24, 1
      %p47 = por %p45, %p46
      %p49 = scmp.ne.s32.totalorder %s32, %s48
      %p50 = scmp.eq.s32.totalorder %s24, 0
      %p51 = por %p49, %p50
      %s53 = sadd.s32 %s52, 1
      %p56 = scmp.eq.s32.totalorder %s18, 1
      %p57 = scmp.ne.s32.totalorder %s52, %s54
      %p58 = scmp.eq.s32.totalorder %s18, 0
      %p59 = por %p57, %p58
      %p60 = scmp.ne.s32.totalorder %s52, %s54
      %p61 = scmp.eq.s32.totalorder %s23, 1
      %p62 = por %p60, %p61
      %p63 = scmp.ne.s32.totalorder %s54, %s55
      %p64 = scmp.eq.s32.totalorder %s23, 0
      %p65 = por %p63, %p64
      %p66 = scmp.ne.s32.totalorder %s54, %s55
      %p67 = scmp.eq.s32.totalorder %s24, 1
      %p68 = por %p66, %p67
      %p70 = scmp.ne.s32.totalorder %s55, %s69
      %p71 = scmp.eq.s32.totalorder %s24, 0
      %p72 = por %p70, %p71
      %s74 = sadd.s32 %s73, 1
      %p77 = scmp.eq.s32.totalorder %s18, 1
      %p78 = scmp.ne.s32.totalorder %s73, %s75
      %p79 = scmp.eq.s32.totalorder %s18, 0
      %p80 = por %p78, %p79
      %p81 = scmp.ne.s32.totalorder %s73, %s75
      %p82 = scmp.eq.s32.totalorder %s23, 1
      %p83 = por %p81, %p82
      %p84 = scmp.ne.s32.totalorder %s75, %s76
      %p85 = scmp.eq.s32.totalorder %s23, 0
      %p86 = por %p84, %p85
      %p87 = scmp.ne.s32.totalorder %s75, %s76
      %p88 = scmp.eq.s32.totalorder %s24, 1
      %p89 = por %p87, %p88
      %p91 = scmp.ne.s32.totalorder %s76, %s90
      %p92 = scmp.eq.s32.totalorder %s24, 0
      %p93 = por %p91, %p92
      %s95 = sadd.s32 %s94, 1
      %p98 = scmp.eq.s32.totalorder %s18, 1
      %p99 = scmp.ne.s32.totalorder %s94, %s96
      %p100 = scmp.eq.s32.totalorder %s18, 0
      %p101 = por %p99, %p100
      %p102 = scmp.ne.s32.totalorder %s94, %s96
      %p103 = scmp.eq.s32.totalorder %s23, 1
      %p104 = por %p102, %p103
      %p105 = scmp.ne.s32.totalorder %s96, %s97
      %p106 = scmp.eq.s32.totalorder %s23, 0
      %p107 = por %p105, %p106
      %p108 = scmp.ne.s32.totalorder %s96, %s97
      %p109 = scmp.eq.s32.totalorder %s24, 1
      %p110 = por %p108, %p109
      %p112 = scmp.ne.s32.totalorder %s97, %s111
      %p113 = scmp.eq.s32.totalorder %s24, 0
      %p114 = por %p112, %p113
      %s116 = sadd.s32 %s115, 1
      %p119 = scmp.eq.s32.totalorder %s18, 1
      %p120 = scmp.ne.s32.totalorder %s115, %s117
      %p121 = scmp.eq.s32.totalorder %s18, 0
      %p122 = por %p120, %p121
      %p123 = scmp.ne.s32.totalorder %s115, %s117
      %p124 = scmp.eq.s32.totalorder %s23, 1
      %p125 = por %p123, %p124
      %p126 = scmp.ne.s32.totalorder %s117, %s118
      %p127 = scmp.eq.s32.totalorder %s23, 0
      %p128 = por %p126, %p127
      %p129 = scmp.ne.s32.totalorder %s117, %s118
      %p130 = scmp.eq.s32.totalorder %s24, 1
      %p131 = por %p129, %p130
      %p133 = scmp.ne.s32.totalorder %s118, %s132
      %p134 = scmp.eq.s32.totalorder %s24, 0
      %p135 = por %p133, %p134
      %s136 = ssub.s32 %s18, %s25
      %p137 = scmp.eq.s32.totalorder %s136, 0
      %s139 = sadd.s32 %s138, 1
      %s140 = scalar_select %p137, %s138, %s139
      %p143 = pneg %p137
      %p144 = scmp.eq.s32.totalorder %s18, 1
      %p145 = por %p143, %p144
      %p146 = scmp.ne.s32.totalorder %s138, %s141
      %p147 = scmp.eq.s32.totalorder %s18, 0
      %p148 = por %p146, %p147
      %p149 = scmp.ne.s32.totalorder %s138, %s141
      %p150 = scmp.eq.s32.totalorder %s23, 1
      %p151 = por %p149, %p150
      %p152 = scmp.ne.s32.totalorder %s141, %s142
      %p153 = scmp.eq.s32.totalorder %s23, 0
      %p154 = por %p152, %p153
      %p155 = scmp.ne.s32.totalorder %s141, %s142
      %p156 = scmp.eq.s32.totalorder %s24, 1
      %p157 = por %p155, %p156
      %p159 = scmp.ne.s32.totalorder %s142, %s158
      %p160 = scmp.eq.s32.totalorder %s24, 0
      %p161 = por %p159, %p160
      %p162 = scmp.le.s32.totalorder 1, %s18
      %p163 = scmp.lt.s32.totalorder %s18, 3
      %p164 = pnand %p162, %p163
      %p165 = pneg %p164
      // Predicated region
      $region9: #{tpu_custom_call.1} parent=5 // pred_check
        _
      $region10: #{tpu_custom_call.1} parent=5 // pred_check_branch
        %167 = sbr.rel (%p164) target = $region12
      $region11: #{tpu_custom_call.1} parent=5 // pred_region
        %s168 = ssub.s32 %s18, 1
        // Predicated region
        $region13: #{tpu_custom_call.1} parent=11 // pred_check
          %p169 = pneg %p65
        $region14: #{tpu_custom_call.1} parent=11 // pred_check_branch
          %171 = sbr.rel (%p169) target = $region16
        $region15: #{tpu_custom_call.1} parent=11 // pred_region
          %173 = vsyncadd [#allocation6], 0
          %s174 = sshll.u32 %s1, 4
          %s175 = int_to_ptr.hbm [resolvable:$true] %s174
          %s176 = sshll.u32 [#allocation5], 4
          %s177 = int_to_ptr.vmem [resolvable:$true] %s176
          %182 = dma.hbm_to_vmem [thread:$0]  %s175, 1024, %s177, [#allocation6], 64, 64, 4
        $region16: #{tpu_custom_call.1} parent=11 // pred_fallthru
          _
        // Predicated region
        $region17: #{tpu_custom_call.1} parent=11 // pred_check
          %p183 = pneg %p86
        $region18: #{tpu_custom_call.1} parent=11 // pred_check_branch
          %185 = sbr.rel (%p183) target = $region20
        $region19: #{tpu_custom_call.1} parent=11 // pred_region
          _
        $region20: #{tpu_custom_call.1} parent=11 // pred_fallthru
          _
        // Predicated region
        $region21: #{tpu_custom_call.1} parent=11 // pred_check
          %p186 = pneg %p107
        $region22: #{tpu_custom_call.1} parent=11 // pred_check_branch
          %188 = sbr.rel (%p186) target = $region24
        $region23: #{tpu_custom_call.1} parent=11 // pred_region
          %190 = vsyncadd [#allocation6], 0
          %s191 = sshll.u32 %s3, 4
          %s192 = int_to_ptr.hbm [resolvable:$true] %s191
          %s193 = sshll.u32 [#allocation7], 4
          %s194 = int_to_ptr.vmem [resolvable:$true] %s193
          %199 = dma.hbm_to_vmem [thread:$0]  %s192, 1024, %s194, [#allocation6], 64, 64, 4
        $region24: #{tpu_custom_call.1} parent=11 // pred_fallthru
          _
        // Predicated region
        $region25: #{tpu_custom_call.1} parent=11 // pred_check
          %p200 = pneg %p128
        $region26: #{tpu_custom_call.1} parent=11 // pred_check_branch
          %202 = sbr.rel (%p200) target = $region28
        $region27: #{tpu_custom_call.1} parent=11 // pred_region
          _
        $region28: #{tpu_custom_call.1} parent=11 // pred_fallthru
          _
      $region12: #{tpu_custom_call.1} parent=5 // pred_fallthru
        _
      %p203 = scmp.lt.s32.totalorder %s18, 2
      // Predicated region
      $region29: #{tpu_custom_call.1} parent=5 // pred_check
        %p204 = pneg %p203
      $region30: #{tpu_custom_call.1} parent=5 // pred_check_branch
        %206 = sbr.rel (%p204) target = $region32
      $region31: #{tpu_custom_call.1} parent=5 // pred_region
        // Predicated region
        $region33: #{tpu_custom_call.1} parent=31 // pred_check
          %p207 = pneg %p38
        $region34: #{tpu_custom_call.1} parent=31 // pred_check_branch
          %209 = sbr.rel (%p207) target = $region36
        $region35: #{tpu_custom_call.1} parent=31 // pred_region
          %s210 = sand.u32 %s28, 1
          %s211 = scalar_lea.sflag [#allocation3], %s210
          %s212 = sand.u32 %s28, 1
          %s213 = smul.addr %s212, 8
          %s214 = scalar_lea.vmem [#allocation2], %s213
          %216 = vsyncadd %s211, 0
          %s217 = smul.addr %s18, 8
          %s218 = scalar_lea.hbm %s0, %s217
          %s220 = sshll.u32 %s218, 4
          %s221 = int_to_ptr.hbm [resolvable:$true] %s220
          %s222 = sshll.u32 %s214, 4
          %s223 = int_to_ptr.vmem [resolvable:$true] %s222
          %225 = dma.hbm_to_vmem [thread:$0]  %s221, 128, %s223, %s211
        $region36: #{tpu_custom_call.1} parent=31 // pred_fallthru
          _
      $region32: #{tpu_custom_call.1} parent=5 // pred_fallthru
        _
      %p226 = scmp.le.s32.totalorder 1, %s18
      %p227 = scmp.lt.s32.totalorder %s18, 3
      %p228 = pnand %p226, %p227
      %p229 = pneg %p228
      // Predicated region
      $region37: #{tpu_custom_call.1} parent=5 // pred_check
        _
      $region38: #{tpu_custom_call.1} parent=5 // pred_check_branch
        %231 = sbr.rel (%p228) target = $region40
      $region39: #{tpu_custom_call.1} parent=5 // pred_region
        %s232 = ssub.s32 %s18, 1
        %s233 = sand.u32 %s31, 1
        %s234 = scalar_lea.sflag [#allocation3], %s233
        %s235 = sand.u32 %s31, 1
        %s236 = smul.addr %s235, 8
        %s237 = scalar_lea.vmem [#allocation2], %s236
        // Predicated region
        $region41: #{tpu_custom_call.1} parent=39 // pred_check
          %p238 = pneg %p44
        $region42: #{tpu_custom_call.1} parent=39 // pred_check_branch
          %240 = sbr.rel (%p238) target = $region44
        $region43: #{tpu_custom_call.1} parent=39 // pred_region
          %242 = dma.done %s234, 128
        $region44: #{tpu_custom_call.1} parent=39 // pred_fallthru
          _
        // Predicated region
        $region45: #{tpu_custom_call.1} parent=39 // pred_check
          %p243 = pneg %p65
        $region46: #{tpu_custom_call.1} parent=39 // pred_check_branch
          %245 = sbr.rel (%p243) target = $region48
        $region47: #{tpu_custom_call.1} parent=39 // pred_region
          %247 = dma.done [#allocation6], 1024
        $region48: #{tpu_custom_call.1} parent=39 // pred_fallthru
          _
        // Predicated region
        $region49: #{tpu_custom_call.1} parent=39 // pred_check
          %p248 = pneg %p107
        $region50: #{tpu_custom_call.1} parent=39 // pred_check_branch
          %250 = sbr.rel (%p248) target = $region52
        $region51: #{tpu_custom_call.1} parent=39 // pred_region
          %252 = dma.done [#allocation6], 1024
        $region52: #{tpu_custom_call.1} parent=39 // pred_fallthru
          _
        %s253 = sand.u32 %s31, 1
        %s254 = scalar_lea.sflag [#allocation3], %s253
        %s255 = sand.u32 %s31, 1
        %s256 = smul.addr %s255, 8
        %s257 = scalar_lea.vmem [#allocation2], %s256
        %p258 = pneg %p44
        %p259 = pneg %p41
        %p260 = pneg %p65
        %p261 = pneg %p62
        %p262 = pneg %p86
        %p263 = pneg %p83
        %p264 = pneg %p107
        %p265 = pneg %p104
        %p266 = pneg %p128
        %p267 = pneg %p125
        %p268 = pneg %p154
        %p269 = pneg %p151
        %s270 = sand.u32 %s141, 1
        %s271 = scalar_lea.sflag [#allocation4], %s270
        %s272 = sand.u32 %s141, 1
        %s273 = smul.addr %s272, 8
        %s274 = scalar_lea.vmem [#allocation8], %s273
        %v275 = vld [vmem:[%s237] sm:$0xff]
        %v276 = vpack.c.bf16 %v275, %v275
        %v277 = vld [vmem:[#allocation5] sm:$0xf]
        %v278 = vld [vmem:[#allocation5 + $0x4] sm:$0xf]
        %v279 = vld [vmem:[#allocation5 + $0x8] sm:$0xf]
        %v280 = vld [vmem:[#allocation5 + $0xc] sm:$0xf]
        %v281 = vld [vmem:[#allocation5 + $0x10] sm:$0xf]
        %v282 = vld [vmem:[#allocation5 + $0x14] sm:$0xf]
        %v283 = vld [vmem:[#allocation5 + $0x18] sm:$0xf]
        %v284 = vld [vmem:[#allocation5 + $0x1c] sm:$0xf]
        %v285 = vld [vmem:[#allocation5 + $0x20] sm:$0xf]
        %v286 = vld [vmem:[#allocation5 + $0x24] sm:$0xf]
        %v287 = vld [vmem:[#allocation5 + $0x28] sm:$0xf]
        %v288 = vld [vmem:[#allocation5 + $0x2c] sm:$0xf]
        %v289 = vld [vmem:[#allocation5 + $0x30] sm:$0xf]
        %v290 = vld [vmem:[#allocation5 + $0x34] sm:$0xf]
        %v291 = vld [vmem:[#allocation5 + $0x38] sm:$0xf]
        %v292 = vld [vmem:[#allocation5 + $0x3c] sm:$0xf]
        %v293 = vld [vmem:[%s2] sm:$0x1]
        %v295 = vperm.slane %v293, 0
        %v313 = vunpack.c.l.b16 %v277
        %v314 = vunpack.c.l.b16 %v278
        %v315 = vunpack.c.l.b16 %v279
        %v316 = vunpack.c.l.b16 %v280
        %v317 = vunpack.c.l.b16 %v281
        %v318 = vunpack.c.l.b16 %v282
        %v319 = vunpack.c.l.b16 %v283
        %v320 = vunpack.c.l.b16 %v284
        %v321 = vunpack.c.l.b16 %v285
        %v322 = vunpack.c.l.b16 %v286
        %v323 = vunpack.c.l.b16 %v287
        %v324 = vunpack.c.l.b16 %v288
        %v325 = vunpack.c.l.b16 %v289
        %v326 = vunpack.c.l.b16 %v290
        %v327 = vunpack.c.l.b16 %v291
        %v328 = vunpack.c.l.b16 %v292
        %v329 = vpack.c.b16 %v314, %v313
        %v330 = vpack.c.b16 %v316, %v315
        %v331 = vpack.c.b16 %v318, %v317
        %v332 = vpack.c.b16 %v320, %v319
        %v333 = vpack.c.b16 %v322, %v321
        %v334 = vpack.c.b16 %v324, %v323
        %v335 = vpack.c.b16 %v326, %v325
        %v336 = vpack.c.b16 %v328, %v327
        %345 = vmatpush.bf16.msra.mxu0 %v336
        %346 = vmatpush.bf16.msra.mxu0 %v335
        %347 = vmatpush.bf16.msra.mxu0 %v334
        %348 = vmatpush.bf16.msra.mxu0 %v333
        %349 = vmatpush.bf16.msra.mxu0 %v332
        %350 = vmatpush.bf16.msra.mxu0 %v331
        %351 = vmatpush.bf16.msra.mxu0 %v330
        %352 = vmatpush.bf16.msra.mxu0 %v329
        %353 = vmatmul.bf16.gmra.mxu0 %v276
        %v354 = vpop.f32.mrf.mxu0
        %v355 = vadd.f32 %v295, %v354
        %v356 = vpop.f32.mrf.mxu0
        %357 = vdwg.mxu0
        %v358 = vmul.f32 %v355, %v355
        %v359 = vmul.f32 %v355, %v358
        %v360 = vmul.f32 %v359, 0.044715
        %v361 = vadd.f32 %v355, %v360
        %v362 = vmul.f32 %v361, 0.7978846
        %v363 = vtanh.pop %v362
        %v364 = vadd.f32 %v363, 1.0
        %v365 = vmul.f32 %v364, 0.5
        %v366 = vmul.f32 %v355, %v365
        %v367 = vpack.c.bf16 %v366, %v366
        %v368 = vld [vmem:[#allocation7] sm:$0xf]
        %v369 = vld [vmem:[#allocation7 + $0x4] sm:$0xf]
        %v370 = vld [vmem:[#allocation7 + $0x8] sm:$0xf]
        %v371 = vld [vmem:[#allocation7 + $0xc] sm:$0xf]
        %v372 = vld [vmem:[#allocation7 + $0x10] sm:$0xf]
        %v373 = vld [vmem:[#allocation7 + $0x14] sm:$0xf]
        %v374 = vld [vmem:[#allocation7 + $0x18] sm:$0xf]
        %v375 = vld [vmem:[#allocation7 + $0x1c] sm:$0xf]
        %v376 = vld [vmem:[#allocation7 + $0x20] sm:$0xf]
        %v377 = vld [vmem:[#allocation7 + $0x24] sm:$0xf]
        %v378 = vld [vmem:[#allocation7 + $0x28] sm:$0xf]
        %v379 = vld [vmem:[#allocation7 + $0x2c] sm:$0xf]
        %v380 = vld [vmem:[#allocation7 + $0x30] sm:$0xf]
        %v381 = vld [vmem:[#allocation7 + $0x34] sm:$0xf]
        %v382 = vld [vmem:[#allocation7 + $0x38] sm:$0xf]
        %v383 = vld [vmem:[#allocation7 + $0x3c] sm:$0xf]
        %v384 = vld [vmem:[%s4] sm:$0x1]
        %v386 = vperm.slane %v384, 0
        %v404 = vunpack.c.l.b16 %v368
        %v405 = vunpack.c.l.b16 %v369
        %v406 = vunpack.c.l.b16 %v370
        %v407 = vunpack.c.l.b16 %v371
        %v408 = vunpack.c.l.b16 %v372
        %v409 = vunpack.c.l.b16 %v373
        %v410 = vunpack.c.l.b16 %v374
        %v411 = vunpack.c.l.b16 %v375
        %v412 = vunpack.c.l.b16 %v376
        %v413 = vunpack.c.l.b16 %v377
        %v414 = vunpack.c.l.b16 %v378
        %v415 = vunpack.c.l.b16 %v379
        %v416 = vunpack.c.l.b16 %v380
        %v417 = vunpack.c.l.b16 %v381
        %v418 = vunpack.c.l.b16 %v382
        %v419 = vunpack.c.l.b16 %v383
        %v420 = vpack.c.b16 %v405, %v404
        %v421 = vpack.c.b16 %v407, %v406
        %v422 = vpack.c.b16 %v409, %v408
        %v423 = vpack.c.b16 %v411, %v410
        %v424 = vpack.c.b16 %v413, %v412
        %v425 = vpack.c.b16 %v415, %v414
        %v426 = vpack.c.b16 %v417, %v416
        %v427 = vpack.c.b16 %v419, %v418
        %436 = vmatpush.bf16.msra.mxu0 %v427
        %437 = vmatpush.bf16.msra.mxu0 %v426
        %438 = vmatpush.bf16.msra.mxu0 %v425
        %439 = vmatpush.bf16.msra.mxu0 %v424
        %440 = vmatpush.bf16.msra.mxu0 %v423
        %441 = vmatpush.bf16.msra.mxu0 %v422
        %442 = vmatpush.bf16.msra.mxu0 %v421
        %443 = vmatpush.bf16.msra.mxu0 %v420
        %444 = vmatmul.bf16.gmra.mxu0 %v367
        %v445 = vpop.f32.mrf.mxu0
        %v446 = vadd.f32 %v386, %v445
        %v447 = vpop.f32.mrf.mxu0
        %448 = vdwg.mxu0
        %v449 = vadd.f32 %v446, %v275
        %450 = vst [vmem:[%s274] sm:$0xff] %v449
        %s451 = sand.u32 %s141, 1
        %s452 = scalar_lea.sflag [#allocation4], %s451
        %s453 = sand.u32 %s141, 1
        %s454 = smul.addr %s453, 8
        %s455 = scalar_lea.vmem [#allocation8], %s454
        // Predicated region
        $region53: #{tpu_custom_call.1} parent=39 // pred_check
          %p456 = pneg %p151
        $region54: #{tpu_custom_call.1} parent=39 // pred_check_branch
          %458 = sbr.rel (%p456) target = $region56
        $region55: #{tpu_custom_call.1} parent=39 // pred_region
          %460 = vsyncadd %s452, 0
          %s461 = smul.addr %s23, 8
          %s462 = scalar_lea.hbm %s5, %s461
          %s464 = sshll.u32 %s455, 4
          %s465 = int_to_ptr.vmem [resolvable:$true] %s464
          %s466 = sshll.u32 %s462, 4
          %s467 = int_to_ptr.hbm [resolvable:$true] %s466
          %469 = dma.vmem_to_hbm [thread:$0]  %s465, 128, %s467, %s452
        $region56: #{tpu_custom_call.1} parent=39 // pred_fallthru
          _
      $region40: #{tpu_custom_call.1} parent=5 // pred_fallthru
        _
      %p470 = scmp.le.s32.totalorder 2, %s18
      // Predicated region
      $region57: #{tpu_custom_call.1} parent=5 // pred_check
        %p471 = pneg %p470
      $region58: #{tpu_custom_call.1} parent=5 // pred_check_branch
        %473 = sbr.rel (%p471) target = $region60
      $region59: #{tpu_custom_call.1} parent=5 // pred_region
        %s474 = ssub.s32 %s18, 2
        // Predicated region
        $region61: #{tpu_custom_call.1} parent=59 // pred_check
          %p475 = pneg %p157
        $region62: #{tpu_custom_call.1} parent=59 // pred_check_branch
          %477 = sbr.rel (%p475) target = $region64
        $region63: #{tpu_custom_call.1} parent=59 // pred_region
          %s478 = sand.u32 %s142, 1
          %s479 = scalar_lea.sflag [#allocation4], %s478
          %s480 = sand.u32 %s142, 1
          %s481 = smul.addr %s480, 8
          %s482 = scalar_lea.vmem [#allocation8], %s481
          %484 = dma.done %s479, 128
        $region64: #{tpu_custom_call.1} parent=59 // pred_fallthru
          _
      $region60: #{tpu_custom_call.1} parent=5 // pred_fallthru
        _
    $region6: #{tpu_custom_call.1} parent=1 // loop_footer
      %s22 = sadd.s32 1, %s18
    $region7: #{tpu_custom_call.1} parent=1 // loop_footer_branch
      %17 = sbr.rel target = $region3
    $region8: #{tpu_custom_call.1} parent=1 // loop_exit
      _
    %485 = vsyncpa [#allocation3], 1
    %s486 = scalar_lea.sflag [#allocation3], 1
    %487 = vsyncpa %s486, 1
    %488 = vsyncpa [#allocation6], 1
    %489 = vsyncpa [#allocation4], 1
    %s490 = scalar_lea.sflag [#allocation4], 1
    %491 = vsyncpa %s490, 1

</llo_original>
